<compile_context>
chip_gen: v6e
topology: v6e:2x2x1
jax: 0.10.0
libtpu: 0.0.40
codegen_flags: <defaults>
</compile_context>

<pallas_src>
import jax
import jax.numpy as jnp
from jax.experimental import pallas as pl
from jax.experimental.pallas import tpu as pltpu


def _cdiv(a, b):
    return (a + b - 1) // b


def _round_up(a, b):
    return _cdiv(a, b) * b


def _perturb_kernel(x_ref, t_ref, o_ref):
    # x_ref/o_ref: (TB, TL); t_ref: (1, TL) broadcast over the batch tile.
    # Pure elementwise VPU work; the kernel is HBM-bandwidth bound.
    o_ref[...] = jnp.clip(x_ref[...] + t_ref[...], -1.0, 1.0)


def universal_perturbation_forward(
    x,
    trigger,
    epsilon=32.0 / 255.0,
    *,
    target_block_bytes=4 << 20,   # ~4 MiB blocks: near-roofline on v6e/v7x
    donate_x=False,               # set True only when the caller donates x
):
    """x: (B, C, H, W), trigger: (C, H, W) broadcast over the batch."""
    B = int(x.shape[0])
    per_sample = 1
    for d in x.shape[1:]:
        per_sample *= int(d)
    assert per_sample == int(trigger.size), "trigger must match per-sample size"

    itemsize = jnp.dtype(x.dtype).itemsize
    LANE = 128
    SUB = max(8, 32 // itemsize)  # sublane tiling: 8 (f32), 16 (bf16), 32 (i8)

    # Clamp the trigger once, outside the kernel (touches only C*H*W elements).
    t2 = jnp.clip(
        trigger.reshape(1, per_sample).astype(x.dtype), -2.0 * epsilon, 2.0 * epsilon
    )
    x2 = x.reshape(B, per_sample)
    sample_bytes = per_sample * itemsize

    # ---- batch tile TB (second-to-last block dim: multiple of SUB, or == B) ----
    if B <= SUB:
        TB = B
    else:
        fit = target_block_bytes // max(1, sample_bytes)  # whole samples / block
        if fit >= SUB:
            TB = max(SUB, min((fit // SUB) * SUB, (B // SUB) * SUB))
        else:
            TB = SUB

    # ---- lane tile TL (last block dim: == per_sample, or a multiple of 128) ----
    blk_budget_elems = max(LANE, target_block_bytes // (TB * itemsize))
    if per_sample <= blk_budget_elems:
        TL = per_sample  # equals the full dim -> legal for any alignment
    else:
        floor128 = max(LANE, (blk_budget_elems // LANE) * LANE)
        n_l = _cdiv(per_sample, floor128)
        TL = _round_up(_cdiv(per_sample, n_l), LANE)  # balanced 128-aligned tiles

    grid_l = _cdiv(per_sample, TL)
    grid_b = _cdiv(B, TB)

    # Grid order: lane tiles outer, batch tiles inner -> the trigger's block
    # index (0, l) is constant across the inner loop and is fetched once per
    # lane tile. Boundary blocks (B % TB, per_sample % TL) are masked by Pallas.
    out = pl.pallas_call(
        _perturb_kernel,
        out_shape=jax.ShapeDtypeStruct((B, per_sample), x.dtype),
        grid_spec=pltpu.PrefetchScalarGridSpec(
            num_scalar_prefetch=0,
            grid=(grid_l, grid_b),
            in_specs=[
                pl.BlockSpec((TB, TL), lambda l, b: (b, l)),   # x batch/lane tile
                pl.BlockSpec((1, TL), lambda l, b: (0, l)),    # shared trigger tile
            ],
            out_specs=pl.BlockSpec((TB, TL), lambda l, b: (b, l)),
        ),
        compiler_params=pltpu.CompilerParams(
            dimension_semantics=("parallel", "parallel"),
            # Worst-case residency ~= 2*(x + out + trigger) blocks ~= 24 MiB;
            # 48 MiB gives headroom yet stays under v7x's 64 MiB physical VMEM.
            vmem_limit_bytes=48 * 1024 * 1024,
        ),
        input_output_aliases=({0: 0} if donate_x else {}),
    )(x2, t2)

    return out.reshape(x.shape)


def _reference(x, trigger, epsilon):
    t = jnp.clip(trigger, -2.0 * epsilon, 2.0 * epsilon)
    return jnp.clip(x + t, -1.0, 1.0)


def _check(x, trigger, epsilon, **kwargs):
    y = jax.block_until_ready(universal_perturbation_forward(x, trigger, epsilon, **kwargs))
    y_ref = _reference(x, trigger, epsilon)
    assert y.shape == x.shape and y.dtype == x.dtype
    assert jnp.allclose(y, y_ref, atol=1e-6), "mismatch vs reference"


if __name__ == "__main__":
    key = jax.random.PRNGKey(0)
    epsilon = 32.0 / 255.0

    # 1) Main case: B=2, C=4, H=W=16 (whole sample per block, single grid step).
    k1, k2, k3, k4, k5, k6 = jax.random.split(key, 6)
    x = jax.random.uniform(k1, (2, 4, 16, 16), jnp.float32, minval=-1.2, maxval=1.2)
    trig = 0.01 * jax.random.normal(k2, (4, 16, 16), jnp.float32)
    trig = trig.at[0, 0, 0].set(1.0).at[1, 2, 3].set(-1.0)  # exercise trigger clamp
    _check(x, trig, epsilon)

    # 2) Lane-tiled path with a non-128-aligned sample (masked boundary block),
    #    forced at small scale via a tiny block-byte target.
    xb = jax.random.uniform(k3, (2, 4, 60, 60), jnp.float32, minval=-1.2, maxval=1.2)
    tb = 0.01 * jax.random.normal(k4, (4, 60, 60), jnp.float32)
    _check(xb, tb, epsilon, target_block_bytes=64 * 1024)

    # 3) Batch-tiled path with B not a multiple of 8 (masked partial batch block).
    xc = jax.random.uniform(k5, (10, 4, 16, 16), jnp.float32, minval=-1.2, maxval=1.2)
    tc = 0.01 * jax.random.normal(k6, (4, 16, 16), jnp.float32)
    _check(xc, tc, epsilon)

    print("KERNEL_OK")
</pallas_src>

<mosaic_0001>
module attributes {stable_mosaic.version = 11 : i64} {
  func.func @_perturb_kernel(%arg0: i32, %arg1: i32, %arg2: memref<2x1024xf32, #tpu.memory_space<vmem>>, %arg3: memref<1x1024xf32, #tpu.memory_space<vmem>>, %arg4: memref<2x1024xf32, #tpu.memory_space<vmem>>) attributes {dimension_semantics = [#tpu.dimension_semantics<parallel>, #tpu.dimension_semantics<parallel>], iteration_bounds = array<i64: 1, 1>, scalar_prefetch = 0 : i64, scratch_operands = 0 : i64, tpu.core_type = #tpu.core_type<tc>, window_params = [{transform_indices = @transform_0, window_bounds = array<i64: 2, 1024>}, {transform_indices = @transform_1, window_bounds = array<i64: 1, 1024>}, {transform_indices = @transform_2, window_bounds = array<i64: 2, 1024>}]} {
    %c0 = arith.constant 0 : index
    %c0_0 = arith.constant 0 : index
    %0 = vector.load %arg2[%c0, %c0_0] : memref<2x1024xf32, #tpu.memory_space<vmem>>, vector<2x1024xf32>
    %c0_1 = arith.constant 0 : index
    %c0_2 = arith.constant 0 : index
    %1 = vector.load %arg3[%c0_1, %c0_2] : memref<1x1024xf32, #tpu.memory_space<vmem>>, vector<1x1024xf32>
    %2 = vector.broadcast %1 : vector<1x1024xf32> to vector<2x1024xf32>
    %3 = arith.addf %0, %2 : vector<2x1024xf32>
    %cst = arith.constant -1.000000e+00 : f32
    %cst_3 = arith.constant 1.000000e+00 : f32
    %4 = vector.broadcast %cst : f32 to vector<2x1024xf32>
    %5 = arith.maximumf %4, %3 : vector<2x1024xf32>
    %6 = vector.broadcast %cst_3 : f32 to vector<2x1024xf32>
    %7 = arith.minimumf %6, %5 : vector<2x1024xf32>
    %c0_4 = arith.constant 0 : index
    %c0_5 = arith.constant 0 : index
    %8 = vector.load %arg4[%c0_4, %c0_5] : memref<2x1024xf32, #tpu.memory_space<vmem>>, vector<2x1024xf32>
    tpu.vector_store %arg4[%c0_4, %c0_5], %7 {strides = array<i32>} : memref<2x1024xf32, #tpu.memory_space<vmem>>, vector<2x1024xf32>,
    return
  }
  func.func @transform_0(%arg0: i32, %arg1: i32) -> (i32, i32) {
    %c0_i32 = arith.constant 0 : i32
    return %arg1, %arg0 : i32, i32
  }
  func.func @transform_1(%arg0: i32, %arg1: i32) -> (i32, i32) {
    %c0_i32 = arith.constant 0 : i32
    %c0_i32_0 = arith.constant 0 : i32
    return %c0_i32, %arg0 : i32, i32
  }
  func.func @transform_2(%arg0: i32, %arg1: i32) -> (i32, i32) {
    %c0_i32 = arith.constant 0 : i32
    return %arg1, %arg0 : i32, i32
  }
}

</mosaic_0001>

<llo_original>
// kernel: tpu_custom_call.1
$region0: #{tpu_custom_call.1}
  #allocation0 [shape = 'u32[]', space=smem, size = 0x4, offset = 0x4, fixed_abs, tag = 'smem constant byte address 0x4 - core index']
  #allocation1 [shape = 'u32[144,128]{1,0:T(1,128)}', space=vmem, size = 0x12000, scoped, tag = 'internal scratch']
  %s0 = inlined_call_operand.hbm [shape: f32[2,1024], index: 0, kind: input, shape index: {}]
  %s1 = inlined_call_operand.hbm [shape: f32[1,1024], index: 1, kind: input, shape index: {}]
  %s2 = inlined_call_operand.hbm [shape: f32[2,1024], index: 2, kind: output, shape index: {}]
  %s3 = sld [smem:[#allocation0]]
  $region26: #{tpu_custom_call.1} parent=0
    _
  %s5 = ssub.s32 1, %s3
  %s6 = scalar_select 0, %s5, %s3
  $region1: #{tpu_custom_call.1} parent=0
    #allocation2 [shape = 'u8[8192]{0}', space=vmem, size = 0x2000, scoped, tag = 'input window, operand 0, single buffered']
    #allocation3 [shape = 's32[1]{0}', space=sflag, size = 0x4, scoped, tag = 'scoped memory for tpu_custom_call.1']
    #allocation4 [shape = 's32[1]{0}', space=sflag, size = 0x4, scoped, tag = 'scoped memory for tpu_custom_call.1']
    #allocation5 [shape = 'u8[4096]{0}', space=vmem, size = 0x1000, scoped, tag = 'input window, operand 1, single buffered']
    #allocation6 [shape = 's32[1]{0}', space=sflag, size = 0x4, scoped, tag = 'scoped memory for tpu_custom_call.1']
    #allocation7 [shape = 'u8[8192]{0}', space=vmem, size = 0x2000, scoped, tag = 'output window, operand 0, single buffered']
    %7 = vsyncpa [#allocation3], 0
    %8 = vsyncpa [#allocation6], 0
    %9 = vsyncpa [#allocation4], 0
    // Predicated region
    $region2: #{tpu_custom_call.1} parent=1 // pred_check
      _
    $region3: #{tpu_custom_call.1} parent=1 // pred_check_branch
      %11 = sbr.rel (0) target = $region5
    $region4: #{tpu_custom_call.1} parent=1 // pred_region
      %s13 = ssub.s32 256, 256
      %14 = vsyncadd [#allocation3], %s13
      %s16 = sshll.u32 [#allocation2], 4
      %s17 = int_to_ptr.vmem [resolvable:$true] %s16
      %19 = dma.hbm_to_vmem [thread:$0]  %s0, 256, %s17, [#allocation3]
    $region5: #{tpu_custom_call.1} parent=1 // pred_fallthru
      _
    // Predicated region
    $region6: #{tpu_custom_call.1} parent=1 // pred_check
      _
    $region7: #{tpu_custom_call.1} parent=1 // pred_check_branch
      %21 = sbr.rel (0) target = $region9
    $region8: #{tpu_custom_call.1} parent=1 // pred_region
      %s23 = ssub.s32 128, 128
      %24 = vsyncadd [#allocation6], %s23
      %s26 = sshll.u32 [#allocation5], 4
      %s27 = int_to_ptr.vmem [resolvable:$true] %s26
      %29 = dma.hbm_to_vmem [thread:$0]  %s1, 128, %s27, [#allocation6]
    $region9: #{tpu_custom_call.1} parent=1 // pred_fallthru
      _
    // Predicated region
    $region10: #{tpu_custom_call.1} parent=1 // pred_check
      _
    $region11: #{tpu_custom_call.1} parent=1 // pred_check_branch
      %31 = sbr.rel (0) target = $region13
    $region12: #{tpu_custom_call.1} parent=1 // pred_region
      %32 = dma.done [#allocation3], 256
    $region13: #{tpu_custom_call.1} parent=1 // pred_fallthru
      _
    // Predicated region
    $region14: #{tpu_custom_call.1} parent=1 // pred_check
      _
    $region15: #{tpu_custom_call.1} parent=1 // pred_check_branch
      %34 = sbr.rel (0) target = $region17
    $region16: #{tpu_custom_call.1} parent=1 // pred_region
      %35 = dma.done [#allocation6], 128
    $region17: #{tpu_custom_call.1} parent=1 // pred_fallthru
      _
    %v36 = vld [vmem:[#allocation2] sm:$0xff]
    %v37 = vld [vmem:[#allocation2 + $0x8] sm:$0xff]
    %v38 = vld [vmem:[#allocation5] sm:$0xff]
    %v40 = vlaneseq
    %v41 = vshrl.u32 %v40, 7
    %v42 = vsub.s32 0, %v41
    %v43 = vrot.slane %v38, %v42
    %v44 = vlaneseq
    %v45 = vshrl.u32 %v44, 7
    %v46 = vsub.s32 1, %v45
    %v47 = vrot.slane %v38, %v46
    %v48 = vlaneseq
    %v49 = vshrl.u32 %v48, 7
    %v50 = vsub.s32 2, %v49
    %v51 = vrot.slane %v38, %v50
    %v52 = vlaneseq
    %v53 = vshrl.u32 %v52, 7
    %v54 = vsub.s32 3, %v53
    %v55 = vrot.slane %v38, %v54
    %v56 = vlaneseq
    %v57 = vshrl.u32 %v56, 7
    %v58 = vsub.s32 4, %v57
    %v59 = vrot.slane %v38, %v58
    %v60 = vlaneseq
    %v61 = vshrl.u32 %v60, 7
    %v62 = vsub.s32 5, %v61
    %v63 = vrot.slane %v38, %v62
    %v64 = vlaneseq
    %v65 = vshrl.u32 %v64, 7
    %v66 = vsub.s32 6, %v65
    %v67 = vrot.slane %v38, %v66
    %v68 = vlaneseq
    %v69 = vshrl.u32 %v68, 7
    %v70 = vsub.s32 7, %v69
    %v71 = vrot.slane %v38, %v70
    %v72 = vcombine.low %v43, %v47
    %v73 = vcombine.low %v51, %v55
    %v75 = vunpack.c.l.s4 1983009808
    %v76 = vunpack.c.0.s8 %v75
    %v77 = vlaneseq
    %v78 = vshrl.u32 %v77, 7
    %v79 = vsub.s32 %v76, %v78
    %v80 = vrot.slane %v72, %v79
    %v82 = vunpack.c.l.s4 1983009808
    %v83 = vunpack.c.0.s8 %v82
    %v84 = vlaneseq
    %v85 = vshrl.u32 %v84, 7
    %v86 = vsub.s32 %v83, %v85
    %v87 = vrot.slane %v73, %v86
    %v88 = vcombine.low %v80, %v87
    %v89 = vcombine.low %v59, %v63
    %v90 = vcombine.low %v67, %v71
    %v92 = vunpack.c.l.s4 1983009808
    %v93 = vunpack.c.0.s8 %v92
    %v94 = vlaneseq
    %v95 = vshrl.u32 %v94, 7
    %v96 = vsub.s32 %v93, %v95
    %v97 = vrot.slane %v89, %v96
    %v99 = vunpack.c.l.s4 1983009808
    %v100 = vunpack.c.0.s8 %v99
    %v101 = vlaneseq
    %v102 = vshrl.u32 %v101, 7
    %v103 = vsub.s32 %v100, %v102
    %v104 = vrot.slane %v90, %v103
    %v105 = vcombine.low %v97, %v104
    %v108 = vadd.f32 %v36, %v88
    %v109 = vadd.f32 %v37, %v105
    %v110 = vmax.f32 %v108, -1.0
    %v111 = vmax.f32 %v109, -1.0
    %v112 = vmin.f32 %v110, 1.0
    %v113 = vmin.f32 %v111, 1.0
    %114 = vst [vmem:[#allocation7] sm:$0xff] %v112
    %115 = vst [vmem:[#allocation7 + $0x8] sm:$0xff] %v113
    // Predicated region
    $region18: #{tpu_custom_call.1} parent=1 // pred_check
      _
    $region19: #{tpu_custom_call.1} parent=1 // pred_check_branch
      %117 = sbr.rel (0) target = $region21
    $region20: #{tpu_custom_call.1} parent=1 // pred_region
      %s119 = ssub.s32 256, 256
      %120 = vsyncadd [#allocation4], %s119
      %s122 = sshll.u32 [#allocation7], 4
      %s123 = int_to_ptr.vmem [resolvable:$true] %s122
      %125 = dma.vmem_to_hbm [thread:$0]  %s123, 256, %s2, [#allocation4]
    $region21: #{tpu_custom_call.1} parent=1 // pred_fallthru
      _
    // Predicated region
    $region22: #{tpu_custom_call.1} parent=1 // pred_check
      _
    $region23: #{tpu_custom_call.1} parent=1 // pred_check_branch
      %127 = sbr.rel (0) target = $region25
    $region24: #{tpu_custom_call.1} parent=1 // pred_region
      %128 = dma.done [#allocation4], 256
    $region25: #{tpu_custom_call.1} parent=1 // pred_fallthru
      _
    %129 = vsyncpa [#allocation3], 1
    %130 = vsyncpa [#allocation6], 1
    %131 = vsyncpa [#allocation4], 1

</llo_original>
